<compile_context>
chip_gen: v5e
topology: v5e:2x2
jax: 0.10.0
libtpu: 0.0.40
codegen_flags: <defaults>
</compile_context>

<pallas_src>
import jax
import jax.numpy as jnp
from jax import lax
from jax.experimental import pallas as pl
from jax.experimental.pallas import tpu as pltpu

_SUBLANE = 8                      # rows per sublane tile for 32-bit words
_TILE_TARGET_BYTES = 512 * 1024   # aim for a few-hundred-KiB output tile per grid step
_MAX_GROUP = 256                  # upper bound on rows gathered per grid step
_MAX_SEMS = 8                     # DMA semaphores cycled across in-flight row copies


def _ceil_to(x, m):
    return ((x + m - 1) // m) * m


def _vmem_capacity_bytes():
    try:
        return int(pltpu.get_tpu_info().vmem_capacity_bytes)
    except Exception:
        return 64 * 1024 * 1024  # conservative: v7x physical VMEM per TensorCore


# --------------------------------------------------------------------------
# Kernels
# --------------------------------------------------------------------------
def _make_streaming_kernel(group, nsem):
    """Table stays in HBM; each step DMAs `group` rows straight into out_ref."""

    def kernel(ids_ref, table_hbm, out_ref, sems):
        g = pl.program_id(0)
        base = pl.multiple_of(g * group, group)
        # Hoist every SMEM id read (and descriptor build) ahead of all starts/waits:
        # a DMA .wait() breaks SMEM sst->sld forwarding.
        copies = []
        for r in range(group):
            row = ids_ref[base + r]
            copies.append(
                pltpu.make_async_copy(
                    table_hbm.at[pl.ds(row, 1), :],
                    out_ref.at[pl.ds(r, 1), :],
                    sems.at[r % nsem],
                )
            )
        for cp in copies:  # all row fetches in flight together
            cp.start()
        for cp in copies:  # drain; out-block writeback overlaps the next step (double-buffered)
            cp.wait()

    return kernel


def _make_resident_kernel(group):
    """Table DMA'd into VMEM once (single-buffered scratch); in-VMEM gather per step."""

    def kernel(ids_ref, table_hbm, out_ref, tbl_vmem, sem):
        @pl.when(pl.program_id(0) == 0)
        def _():
            cp = pltpu.make_async_copy(table_hbm, tbl_vmem, sem)
            cp.start()
            cp.wait()

        base = pl.multiple_of(pl.program_id(0) * group, group)
        rows = []
        for r in range(group):
            row = ids_ref[base + r]
            rows.append(tbl_vmem[pl.ds(row, 1), :])
        # Single lane/sublane-dense full-tile store (no per-row masked stores).
        out_ref[...] = jnp.concatenate(rows, axis=0)

    return kernel


# --------------------------------------------------------------------------
# Wrapper
# --------------------------------------------------------------------------
def efficient_network_forward(integer_ids, person_cache, *, mode="auto"):
    """out[i, :] = person_cache[integer_ids[i], :] via a Pallas TPU gather kernel.

    integer_ids : (batch,) integer ids
    person_cache: (num_people, num_snps) table (float32 / bfloat16 / int8 ...)
    mode        : "auto" | "resident" | "streaming"
    returns     : (batch, num_snps), same dtype as person_cache
    """
    assert mode in ("auto", "resident", "streaming")
    batch = int(integer_ids.shape[0])
    num_people, num_snps = (int(d) for d in person_cache.shape)
    dtype = person_cache.dtype
    dsize = jnp.dtype(dtype).itemsize
    assert dsize in (1, 2, 4), "person_cache dtype must be 1/2/4 bytes wide"

    # Pad the SNP dim so a packed (32-bit) row is a multiple of 128 lanes -> every
    # store / DMA is unmasked and lane-dense.
    pad_to = 512 // dsize                  # 128 (f32), 256 (bf16), 512 (int8) SNPs
    n_pad = _ceil_to(num_snps, pad_to)
    table = person_cache
    if n_pad != num_snps:
        table = jnp.pad(person_cache, ((0, 0), (0, n_pad - num_snps)))

    # Bit-pack sub-32-bit dtypes into int32 words so row DMAs and output tiles never
    # touch packed-sublane layouts (also makes int8/bf16 storage a near-linear win).
    ratio = 4 // dsize
    if dsize == 4:
        work_dtype = dtype
        table_packed = table
    else:
        work_dtype = jnp.int32
        table_packed = lax.bitcast_convert_type(
            table.reshape(num_people, n_pad // ratio, ratio), jnp.int32
        )
    n_words = n_pad // ratio               # multiple of 128
    row_bytes = n_words * 4
    table_bytes = num_people * row_bytes

    vmem_cap = _vmem_capacity_bytes()
    vmem_budget = int(vmem_cap * 0.7)      # headroom for compiler-internal scratch

    # Rows gathered per grid step: sized so each output tile is a few hundred KiB
    # (amortizes ~0.35us per-step overhead), >= 64 when the batch allows, capped by
    # the batch and by the double-buffered-output VMEM budget.
    desired = max(64, _TILE_TARGET_BYTES // max(row_bytes, 1))
    desired = min(desired, _MAX_GROUP)
    desired = min(desired, _ceil_to(batch, _SUBLANE))
    max_rows_vmem = max(_SUBLANE, (vmem_budget // 3) // max(row_bytes, 1))
    group = max(_SUBLANE, (min(desired, max_rows_vmem) // _SUBLANE) * _SUBLANE)

    padded_batch = _ceil_to(batch, group)
    grid = (padded_batch // group,)
    out_tile_bytes = group * row_bytes

    # TODO(synk): the PyTorch code's dict/CSV lookup would fail loudly on a missing
    # id; clamping instead silently maps out-of-range ids to a valid row.
    ids = jnp.clip(integer_ids.astype(jnp.int32), 0, num_people - 1)
    if padded_batch != batch:
        ids = jnp.concatenate([ids, jnp.zeros((padded_batch - batch,), jnp.int32)])

    # Resident only pays off when streaming would read at least the whole table from
    # HBM anyway (batch >= num_people) AND the table fits VMEM single-buffered.
    gathered_bytes = padded_batch * row_bytes
    resident_need = table_bytes + 2 * out_tile_bytes + (1 << 20)
    if mode == "resident":
        use_resident = True
    elif mode == "streaming":
        use_resident = False
    else:
        use_resident = (gathered_bytes >= table_bytes) and (resident_need <= vmem_budget)

    out_shape = jax.ShapeDtypeStruct((padded_batch, n_words), work_dtype)
    out_spec = pl.BlockSpec((group, n_words), lambda i, ids_pref: (i, 0))
    table_spec = pl.BlockSpec(memory_space=pl.ANY)  # table stays in HBM; DMA'd manually

    if use_resident:
        kernel = _make_resident_kernel(group)
        grid_spec = pltpu.PrefetchScalarGridSpec(
            num_scalar_prefetch=1,
            grid=grid,
            in_specs=[table_spec],
            out_specs=out_spec,
            scratch_shapes=[
                pltpu.VMEM((num_people, n_words), work_dtype),  # single-buffered table
                pltpu.SemaphoreType.DMA(()),
            ],
        )
        # "arbitrary": the one-time table load at step 0 must be seen by every step.
        dim_sem = ("arbitrary",)
        vmem_limit = resident_need + max(resident_need // 4, 2 << 20)
        bytes_accessed = table_bytes + gathered_bytes
    else:
        nsem = min(group, _MAX_SEMS)
        kernel = _make_streaming_kernel(group, nsem)
        grid_spec = pltpu.PrefetchScalarGridSpec(
            num_scalar_prefetch=1,
            grid=grid,
            in_specs=[table_spec],
            out_specs=out_spec,
            scratch_shapes=[pltpu.SemaphoreType.DMA((nsem,))],
        )
        dim_sem = ("parallel",)  # independent steps; lets v7x split across both TCs
        need = 2 * out_tile_bytes
        vmem_limit = need + max(need // 2, 2 << 20)
        bytes_accessed = 2 * gathered_bytes

    vmem_limit = int(min(max(vmem_limit, 32 << 20), int(vmem_cap * 0.9)))

    out = pl.pallas_call(
        kernel,
        out_shape=out_shape,
        grid_spec=grid_spec,
        compiler_params=pltpu.CompilerParams(
            dimension_semantics=dim_sem,
            vmem_limit_bytes=vmem_limit,
        ),
        cost_estimate=pl.CostEstimate(
            flops=0, transcendentals=0, bytes_accessed=int(bytes_accessed)
        ),
    )(ids, table_packed)

    if dsize == 4:
        return out[:batch, :num_snps]
    unpacked = lax.bitcast_convert_type(out, dtype).reshape(padded_batch, n_pad)
    return unpacked[:batch, :num_snps]


# --------------------------------------------------------------------------
# Self-test
# --------------------------------------------------------------------------
if __name__ == "__main__":
    key = jax.random.PRNGKey(0)
    k_cache, k_ids = jax.random.split(key)

    num_people = 16   # synthetic stand-in for listdir(person_cache_dir)
    num_snps = 300    # deliberately NOT a multiple of 128 -> exercises lane padding
    batch = 4         # number of integer_ids passed to forward()

    # Synthetic per-person CSV contents: (num_people, 1 + num_snps); column 0 is the
    # leading element the PyTorch code drops via person_bins[1:].
    raw_person_cache = jax.random.normal(
        k_cache, (num_people, 1 + num_snps), dtype=jnp.float32
    )
    person_cache = raw_person_cache[:, 1:]  # glue: the person_bins[1:] slice

    integer_ids = jax.random.randint(
        k_ids, (batch,), minval=0, maxval=num_people, dtype=jnp.int32
    )
    ref = person_cache[integer_ids, :]

    # Streaming path (default for small batches): rows DMA'd straight into out tiles.
    out_s = jax.block_until_ready(
        efficient_network_forward(integer_ids, person_cache, mode="streaming")
    )
    assert out_s.shape == (batch, num_snps)
    assert bool(jnp.allclose(out_s, ref)), "streaming-path gather mismatch"

    # Auto path (should pick streaming here since batch < num_people).
    out_a = jax.block_until_ready(efficient_network_forward(integer_ids, person_cache))
    assert bool(jnp.allclose(out_a, ref)), "auto-path gather mismatch"

    # Resident path: table loaded into VMEM once (single-buffered), in-VMEM gather.
    out_r = jax.block_until_ready(
        efficient_network_forward(integer_ids, person_cache, mode="resident")
    )
    assert bool(jnp.allclose(out_r, ref)), "resident-path gather mismatch"

    # Narrow-dtype tables (reviewer suggestion): bf16 and int8 SNP bins, bit-packed
    # into 32-bit lanes inside the wrapper so DMAs stay dense.
    pc_bf16 = person_cache.astype(jnp.bfloat16)
    out_b = jax.block_until_ready(
        efficient_network_forward(integer_ids, pc_bf16, mode="streaming")
    )
    assert bool(jnp.allclose(out_b, pc_bf16[integer_ids, :])), "bf16 gather mismatch"

    pc_i8 = jax.random.randint(
        k_cache, (num_people, num_snps), minval=0, maxval=4, dtype=jnp.int8
    )
    out_i = jax.block_until_ready(
        efficient_network_forward(integer_ids, pc_i8, mode="streaming")
    )
    assert bool(jnp.array_equal(out_i, pc_i8[integer_ids, :])), "int8 gather mismatch"

    print("KERNEL_OK")
</pallas_src>

<mosaic_0001>
module attributes {stable_mosaic.version = 11 : i64} {
  func.func @kernel(%arg0: i32, %arg1: memref<8xi32, #tpu.memory_space<smem>>, %arg2: memref<16x384xf32, #tpu.memory_space<any>>, %arg3: memref<8x384xf32, #tpu.memory_space<vmem>>, %arg4: memref<8x!tpu.dma_semaphore, #tpu.memory_space<semaphore_mem>>) attributes {dimension_semantics = [#tpu.dimension_semantics<parallel>], iteration_bounds = array<i64: 1>, scalar_prefetch = 1 : i64, scratch_operands = 1 : i64, tpu.core_type = #tpu.core_type<tc>, window_params = [{}, {transform_indices = @transform_1, window_bounds = array<i64: 8, 384>}]} {
    %c8_i32 = arith.constant 8 : i32
    %0 = arith.muli %arg0, %c8_i32 : i32
    %1 = tpu.assume_multiple %0, 8 : i32
    %c0_i32 = arith.constant 0 : i32
    %2 = arith.addi %1, %c0_i32 : i32
    %3 = arith.index_cast %2 : i32 to index
    %4 = memref.load %arg1[%3] : memref<8xi32, #tpu.memory_space<smem>>
    %c1_i32 = arith.constant 1 : i32
    %5 = arith.addi %1, %c1_i32 : i32
    %6 = arith.index_cast %5 : i32 to index
    %7 = memref.load %arg1[%6] : memref<8xi32, #tpu.memory_space<smem>>
    %c2_i32 = arith.constant 2 : i32
    %8 = arith.addi %1, %c2_i32 : i32
    %9 = arith.index_cast %8 : i32 to index
    %10 = memref.load %arg1[%9] : memref<8xi32, #tpu.memory_space<smem>>
    %c3_i32 = arith.constant 3 : i32
    %11 = arith.addi %1, %c3_i32 : i32
    %12 = arith.index_cast %11 : i32 to index
    %13 = memref.load %arg1[%12] : memref<8xi32, #tpu.memory_space<smem>>
    %c4_i32 = arith.constant 4 : i32
    %14 = arith.addi %1, %c4_i32 : i32
    %15 = arith.index_cast %14 : i32 to index
    %16 = memref.load %arg1[%15] : memref<8xi32, #tpu.memory_space<smem>>
    %c5_i32 = arith.constant 5 : i32
    %17 = arith.addi %1, %c5_i32 : i32
    %18 = arith.index_cast %17 : i32 to index
    %19 = memref.load %arg1[%18] : memref<8xi32, #tpu.memory_space<smem>>
    %c6_i32 = arith.constant 6 : i32
    %20 = arith.addi %1, %c6_i32 : i32
    %21 = arith.index_cast %20 : i32 to index
    %22 = memref.load %arg1[%21] : memref<8xi32, #tpu.memory_space<smem>>
    %c7_i32 = arith.constant 7 : i32
    %23 = arith.addi %1, %c7_i32 : i32
    %24 = arith.index_cast %23 : i32 to index
    %25 = memref.load %arg1[%24] : memref<8xi32, #tpu.memory_space<smem>>
    %c0_i32_0 = arith.constant 0 : i32
    %c0_i32_1 = arith.constant 0 : i32
    %26 = tpu.memref_slice %arg2[%4, %c0_i32_1] : memref<16x384xf32, #tpu.memory_space<any>> -> memref<1x384xf32, #tpu.memory_space<any>>
    %c0_i32_2 = arith.constant 0 : i32
    %c0_i32_3 = arith.constant 0 : i32
    %27 = tpu.memref_slice %arg3[%c0_i32_2, %c0_i32_3] : memref<8x384xf32, #tpu.memory_space<vmem>> -> memref<1x384xf32, #tpu.memory_space<vmem>>
    %28 = tpu.memref_slice %arg4[%c0_i32_0] : memref<8x!tpu.dma_semaphore, #tpu.memory_space<semaphore_mem>> -> memref<1x!tpu.dma_semaphore, #tpu.memory_space<semaphore_mem>>
    %29 = tpu.memref_squeeze %28 : memref<1x!tpu.dma_semaphore, #tpu.memory_space<semaphore_mem>> -> memref<!tpu.dma_semaphore, #tpu.memory_space<semaphore_mem>>
    tpu.enqueue_dma source(%26 : memref<1x384xf32, #tpu.memory_space<any>>) target(%27 : memref<1x384xf32, #tpu.memory_space<vmem>>) target_semaphore(%29 : memref<!tpu.dma_semaphore, #tpu.memory_space<semaphore_mem>>)
    %c1_i32_4 = arith.constant 1 : i32
    %c0_i32_5 = arith.constant 0 : i32
    %30 = tpu.memref_slice %arg2[%7, %c0_i32_5] : memref<16x384xf32, #tpu.memory_space<any>> -> memref<1x384xf32, #tpu.memory_space<any>>
    %c1_i32_6 = arith.constant 1 : i32
    %c0_i32_7 = arith.constant 0 : i32
    %31 = tpu.memref_slice %arg3[%c1_i32_6, %c0_i32_7] : memref<8x384xf32, #tpu.memory_space<vmem>> -> memref<1x384xf32, #tpu.memory_space<vmem>>
    %32 = tpu.memref_slice %arg4[%c1_i32_4] : memref<8x!tpu.dma_semaphore, #tpu.memory_space<semaphore_mem>> -> memref<1x!tpu.dma_semaphore, #tpu.memory_space<semaphore_mem>>
    %33 = tpu.memref_squeeze %32 : memref<1x!tpu.dma_semaphore, #tpu.memory_space<semaphore_mem>> -> memref<!tpu.dma_semaphore, #tpu.memory_space<semaphore_mem>>
    tpu.enqueue_dma source(%30 : memref<1x384xf32, #tpu.memory_space<any>>) target(%31 : memref<1x384xf32, #tpu.memory_space<vmem>>) target_semaphore(%33 : memref<!tpu.dma_semaphore, #tpu.memory_space<semaphore_mem>>)
    %c2_i32_8 = arith.constant 2 : i32
    %c0_i32_9 = arith.constant 0 : i32
    %34 = tpu.memref_slice %arg2[%10, %c0_i32_9] : memref<16x384xf32, #tpu.memory_space<any>> -> memref<1x384xf32, #tpu.memory_space<any>>
    %c2_i32_10 = arith.constant 2 : i32
    %c0_i32_11 = arith.constant 0 : i32
    %35 = tpu.memref_slice %arg3[%c2_i32_10, %c0_i32_11] : memref<8x384xf32, #tpu.memory_space<vmem>> -> memref<1x384xf32, #tpu.memory_space<vmem>>
    %36 = tpu.memref_slice %arg4[%c2_i32_8] : memref<8x!tpu.dma_semaphore, #tpu.memory_space<semaphore_mem>> -> memref<1x!tpu.dma_semaphore, #tpu.memory_space<semaphore_mem>>
    %37 = tpu.memref_squeeze %36 : memref<1x!tpu.dma_semaphore, #tpu.memory_space<semaphore_mem>> -> memref<!tpu.dma_semaphore, #tpu.memory_space<semaphore_mem>>
    tpu.enqueue_dma source(%34 : memref<1x384xf32, #tpu.memory_space<any>>) target(%35 : memref<1x384xf32, #tpu.memory_space<vmem>>) target_semaphore(%37 : memref<!tpu.dma_semaphore, #tpu.memory_space<semaphore_mem>>)
    %c3_i32_12 = arith.constant 3 : i32
    %c0_i32_13 = arith.constant 0 : i32
    %38 = tpu.memref_slice %arg2[%13, %c0_i32_13] : memref<16x384xf32, #tpu.memory_space<any>> -> memref<1x384xf32, #tpu.memory_space<any>>
    %c3_i32_14 = arith.constant 3 : i32
    %c0_i32_15 = arith.constant 0 : i32
    %39 = tpu.memref_slice %arg3[%c3_i32_14, %c0_i32_15] : memref<8x384xf32, #tpu.memory_space<vmem>> -> memref<1x384xf32, #tpu.memory_space<vmem>>
    %40 = tpu.memref_slice %arg4[%c3_i32_12] : memref<8x!tpu.dma_semaphore, #tpu.memory_space<semaphore_mem>> -> memref<1x!tpu.dma_semaphore, #tpu.memory_space<semaphore_mem>>
    %41 = tpu.memref_squeeze %40 : memref<1x!tpu.dma_semaphore, #tpu.memory_space<semaphore_mem>> -> memref<!tpu.dma_semaphore, #tpu.memory_space<semaphore_mem>>
    tpu.enqueue_dma source(%38 : memref<1x384xf32, #tpu.memory_space<any>>) target(%39 : memref<1x384xf32, #tpu.memory_space<vmem>>) target_semaphore(%41 : memref<!tpu.dma_semaphore, #tpu.memory_space<semaphore_mem>>)
    %c4_i32_16 = arith.constant 4 : i32
    %c0_i32_17 = arith.constant 0 : i32
    %42 = tpu.memref_slice %arg2[%16, %c0_i32_17] : memref<16x384xf32, #tpu.memory_space<any>> -> memref<1x384xf32, #tpu.memory_space<any>>
    %c4_i32_18 = arith.constant 4 : i32
    %c0_i32_19 = arith.constant 0 : i32
    %43 = tpu.memref_slice %arg3[%c4_i32_18, %c0_i32_19] : memref<8x384xf32, #tpu.memory_space<vmem>> -> memref<1x384xf32, #tpu.memory_space<vmem>>
    %44 = tpu.memref_slice %arg4[%c4_i32_16] : memref<8x!tpu.dma_semaphore, #tpu.memory_space<semaphore_mem>> -> memref<1x!tpu.dma_semaphore, #tpu.memory_space<semaphore_mem>>
    %45 = tpu.memref_squeeze %44 : memref<1x!tpu.dma_semaphore, #tpu.memory_space<semaphore_mem>> -> memref<!tpu.dma_semaphore, #tpu.memory_space<semaphore_mem>>
    tpu.enqueue_dma source(%42 : memref<1x384xf32, #tpu.memory_space<any>>) target(%43 : memref<1x384xf32, #tpu.memory_space<vmem>>) target_semaphore(%45 : memref<!tpu.dma_semaphore, #tpu.memory_space<semaphore_mem>>)
    %c5_i32_20 = arith.constant 5 : i32
    %c0_i32_21 = arith.constant 0 : i32
    %46 = tpu.memref_slice %arg2[%19, %c0_i32_21] : memref<16x384xf32, #tpu.memory_space<any>> -> memref<1x384xf32, #tpu.memory_space<any>>
    %c5_i32_22 = arith.constant 5 : i32
    %c0_i32_23 = arith.constant 0 : i32
    %47 = tpu.memref_slice %arg3[%c5_i32_22, %c0_i32_23] : memref<8x384xf32, #tpu.memory_space<vmem>> -> memref<1x384xf32, #tpu.memory_space<vmem>>
    %48 = tpu.memref_slice %arg4[%c5_i32_20] : memref<8x!tpu.dma_semaphore, #tpu.memory_space<semaphore_mem>> -> memref<1x!tpu.dma_semaphore, #tpu.memory_space<semaphore_mem>>
    %49 = tpu.memref_squeeze %48 : memref<1x!tpu.dma_semaphore, #tpu.memory_space<semaphore_mem>> -> memref<!tpu.dma_semaphore, #tpu.memory_space<semaphore_mem>>
    tpu.enqueue_dma source(%46 : memref<1x384xf32, #tpu.memory_space<any>>) target(%47 : memref<1x384xf32, #tpu.memory_space<vmem>>) target_semaphore(%49 : memref<!tpu.dma_semaphore, #tpu.memory_space<semaphore_mem>>)
    %c6_i32_24 = arith.constant 6 : i32
    %c0_i32_25 = arith.constant 0 : i32
    %50 = tpu.memref_slice %arg2[%22, %c0_i32_25] : memref<16x384xf32, #tpu.memory_space<any>> -> memref<1x384xf32, #tpu.memory_space<any>>
    %c6_i32_26 = arith.constant 6 : i32
    %c0_i32_27 = arith.constant 0 : i32
    %51 = tpu.memref_slice %arg3[%c6_i32_26, %c0_i32_27] : memref<8x384xf32, #tpu.memory_space<vmem>> -> memref<1x384xf32, #tpu.memory_space<vmem>>
    %52 = tpu.memref_slice %arg4[%c6_i32_24] : memref<8x!tpu.dma_semaphore, #tpu.memory_space<semaphore_mem>> -> memref<1x!tpu.dma_semaphore, #tpu.memory_space<semaphore_mem>>
    %53 = tpu.memref_squeeze %52 : memref<1x!tpu.dma_semaphore, #tpu.memory_space<semaphore_mem>> -> memref<!tpu.dma_semaphore, #tpu.memory_space<semaphore_mem>>
    tpu.enqueue_dma source(%50 : memref<1x384xf32, #tpu.memory_space<any>>) target(%51 : memref<1x384xf32, #tpu.memory_space<vmem>>) target_semaphore(%53 : memref<!tpu.dma_semaphore, #tpu.memory_space<semaphore_mem>>)
    %c7_i32_28 = arith.constant 7 : i32
    %c0_i32_29 = arith.constant 0 : i32
    %54 = tpu.memref_slice %arg2[%25, %c0_i32_29] : memref<16x384xf32, #tpu.memory_space<any>> -> memref<1x384xf32, #tpu.memory_space<any>>
    %c7_i32_30 = arith.constant 7 : i32
    %c0_i32_31 = arith.constant 0 : i32
    %55 = tpu.memref_slice %arg3[%c7_i32_30, %c0_i32_31] : memref<8x384xf32, #tpu.memory_space<vmem>> -> memref<1x384xf32, #tpu.memory_space<vmem>>
    %56 = tpu.memref_slice %arg4[%c7_i32_28] : memref<8x!tpu.dma_semaphore, #tpu.memory_space<semaphore_mem>> -> memref<1x!tpu.dma_semaphore, #tpu.memory_space<semaphore_mem>>
    %57 = tpu.memref_squeeze %56 : memref<1x!tpu.dma_semaphore, #tpu.memory_space<semaphore_mem>> -> memref<!tpu.dma_semaphore, #tpu.memory_space<semaphore_mem>>
    tpu.enqueue_dma source(%54 : memref<1x384xf32, #tpu.memory_space<any>>) target(%55 : memref<1x384xf32, #tpu.memory_space<vmem>>) target_semaphore(%57 : memref<!tpu.dma_semaphore, #tpu.memory_space<semaphore_mem>>)
    %c0_i32_32 = arith.constant 0 : i32
    %c0_i32_33 = arith.constant 0 : i32
    %58 = tpu.memref_slice %arg2[%4, %c0_i32_33] : memref<16x384xf32, #tpu.memory_space<any>> -> memref<1x384xf32, #tpu.memory_space<any>>
    %c0_i32_34 = arith.constant 0 : i32
    %c0_i32_35 = arith.constant 0 : i32
    %59 = tpu.memref_slice %arg3[%c0_i32_34, %c0_i32_35] : memref<8x384xf32, #tpu.memory_space<vmem>> -> memref<1x384xf32, #tpu.memory_space<vmem>>
    %60 = tpu.memref_slice %arg4[%c0_i32_32] : memref<8x!tpu.dma_semaphore, #tpu.memory_space<semaphore_mem>> -> memref<1x!tpu.dma_semaphore, #tpu.memory_space<semaphore_mem>>
    %61 = tpu.memref_squeeze %60 : memref<1x!tpu.dma_semaphore, #tpu.memory_space<semaphore_mem>> -> memref<!tpu.dma_semaphore, #tpu.memory_space<semaphore_mem>>
    tpu.wait_dma2 semaphore(%61 : memref<!tpu.dma_semaphore, #tpu.memory_space<semaphore_mem>>) src(%58 : memref<1x384xf32, #tpu.memory_space<any>>) dst(%59 : memref<1x384xf32, #tpu.memory_space<vmem>>)
    %c1_i32_36 = arith.constant 1 : i32
    %c0_i32_37 = arith.constant 0 : i32
    %62 = tpu.memref_slice %arg2[%7, %c0_i32_37] : memref<16x384xf32, #tpu.memory_space<any>> -> memref<1x384xf32, #tpu.memory_space<any>>
    %c1_i32_38 = arith.constant 1 : i32
    %c0_i32_39 = arith.constant 0 : i32
    %63 = tpu.memref_slice %arg3[%c1_i32_38, %c0_i32_39] : memref<8x384xf32, #tpu.memory_space<vmem>> -> memref<1x384xf32, #tpu.memory_space<vmem>>
    %64 = tpu.memref_slice %arg4[%c1_i32_36] : memref<8x!tpu.dma_semaphore, #tpu.memory_space<semaphore_mem>> -> memref<1x!tpu.dma_semaphore, #tpu.memory_space<semaphore_mem>>
    %65 = tpu.memref_squeeze %64 : memref<1x!tpu.dma_semaphore, #tpu.memory_space<semaphore_mem>> -> memref<!tpu.dma_semaphore, #tpu.memory_space<semaphore_mem>>
    tpu.wait_dma2 semaphore(%65 : memref<!tpu.dma_semaphore, #tpu.memory_space<semaphore_mem>>) src(%62 : memref<1x384xf32, #tpu.memory_space<any>>) dst(%63 : memref<1x384xf32, #tpu.memory_space<vmem>>)
    %c2_i32_40 = arith.constant 2 : i32
    %c0_i32_41 = arith.constant 0 : i32
    %66 = tpu.memref_slice %arg2[%10, %c0_i32_41] : memref<16x384xf32, #tpu.memory_space<any>> -> memref<1x384xf32, #tpu.memory_space<any>>
    %c2_i32_42 = arith.constant 2 : i32
    %c0_i32_43 = arith.constant 0 : i32
    %67 = tpu.memref_slice %arg3[%c2_i32_42, %c0_i32_43] : memref<8x384xf32, #tpu.memory_space<vmem>> -> memref<1x384xf32, #tpu.memory_space<vmem>>
    %68 = tpu.memref_slice %arg4[%c2_i32_40] : memref<8x!tpu.dma_semaphore, #tpu.memory_space<semaphore_mem>> -> memref<1x!tpu.dma_semaphore, #tpu.memory_space<semaphore_mem>>
    %69 = tpu.memref_squeeze %68 : memref<1x!tpu.dma_semaphore, #tpu.memory_space<semaphore_mem>> -> memref<!tpu.dma_semaphore, #tpu.memory_space<semaphore_mem>>
    tpu.wait_dma2 semaphore(%69 : memref<!tpu.dma_semaphore, #tpu.memory_space<semaphore_mem>>) src(%66 : memref<1x384xf32, #tpu.memory_space<any>>) dst(%67 : memref<1x384xf32, #tpu.memory_space<vmem>>)
    %c3_i32_44 = arith.constant 3 : i32
    %c0_i32_45 = arith.constant 0 : i32
    %70 = tpu.memref_slice %arg2[%13, %c0_i32_45] : memref<16x384xf32, #tpu.memory_space<any>> -> memref<1x384xf32, #tpu.memory_space<any>>
    %c3_i32_46 = arith.constant 3 : i32
    %c0_i32_47 = arith.constant 0 : i32
    %71 = tpu.memref_slice %arg3[%c3_i32_46, %c0_i32_47] : memref<8x384xf32, #tpu.memory_space<vmem>> -> memref<1x384xf32, #tpu.memory_space<vmem>>
    %72 = tpu.memref_slice %arg4[%c3_i32_44] : memref<8x!tpu.dma_semaphore, #tpu.memory_space<semaphore_mem>> -> memref<1x!tpu.dma_semaphore, #tpu.memory_space<semaphore_mem>>
    %73 = tpu.memref_squeeze %72 : memref<1x!tpu.dma_semaphore, #tpu.memory_space<semaphore_mem>> -> memref<!tpu.dma_semaphore, #tpu.memory_space<semaphore_mem>>
    tpu.wait_dma2 semaphore(%73 : memref<!tpu.dma_semaphore, #tpu.memory_space<semaphore_mem>>) src(%70 : memref<1x384xf32, #tpu.memory_space<any>>) dst(%71 : memref<1x384xf32, #tpu.memory_space<vmem>>)
    %c4_i32_48 = arith.constant 4 : i32
    %c0_i32_49 = arith.constant 0 : i32
    %74 = tpu.memref_slice %arg2[%16, %c0_i32_49] : memref<16x384xf32, #tpu.memory_space<any>> -> memref<1x384xf32, #tpu.memory_space<any>>
    %c4_i32_50 = arith.constant 4 : i32
    %c0_i32_51 = arith.constant 0 : i32
    %75 = tpu.memref_slice %arg3[%c4_i32_50, %c0_i32_51] : memref<8x384xf32, #tpu.memory_space<vmem>> -> memref<1x384xf32, #tpu.memory_space<vmem>>
    %76 = tpu.memref_slice %arg4[%c4_i32_48] : memref<8x!tpu.dma_semaphore, #tpu.memory_space<semaphore_mem>> -> memref<1x!tpu.dma_semaphore, #tpu.memory_space<semaphore_mem>>
    %77 = tpu.memref_squeeze %76 : memref<1x!tpu.dma_semaphore, #tpu.memory_space<semaphore_mem>> -> memref<!tpu.dma_semaphore, #tpu.memory_space<semaphore_mem>>
    tpu.wait_dma2 semaphore(%77 : memref<!tpu.dma_semaphore, #tpu.memory_space<semaphore_mem>>) src(%74 : memref<1x384xf32, #tpu.memory_space<any>>) dst(%75 : memref<1x384xf32, #tpu.memory_space<vmem>>)
    %c5_i32_52 = arith.constant 5 : i32
    %c0_i32_53 = arith.constant 0 : i32
    %78 = tpu.memref_slice %arg2[%19, %c0_i32_53] : memref<16x384xf32, #tpu.memory_space<any>> -> memref<1x384xf32, #tpu.memory_space<any>>
    %c5_i32_54 = arith.constant 5 : i32
    %c0_i32_55 = arith.constant 0 : i32
    %79 = tpu.memref_slice %arg3[%c5_i32_54, %c0_i32_55] : memref<8x384xf32, #tpu.memory_space<vmem>> -> memref<1x384xf32, #tpu.memory_space<vmem>>
    %80 = tpu.memref_slice %arg4[%c5_i32_52] : memref<8x!tpu.dma_semaphore, #tpu.memory_space<semaphore_mem>> -> memref<1x!tpu.dma_semaphore, #tpu.memory_space<semaphore_mem>>
    %81 = tpu.memref_squeeze %80 : memref<1x!tpu.dma_semaphore, #tpu.memory_space<semaphore_mem>> -> memref<!tpu.dma_semaphore, #tpu.memory_space<semaphore_mem>>
    tpu.wait_dma2 semaphore(%81 : memref<!tpu.dma_semaphore, #tpu.memory_space<semaphore_mem>>) src(%78 : memref<1x384xf32, #tpu.memory_space<any>>) dst(%79 : memref<1x384xf32, #tpu.memory_space<vmem>>)
    %c6_i32_56 = arith.constant 6 : i32
    %c0_i32_57 = arith.constant 0 : i32
    %82 = tpu.memref_slice %arg2[%22, %c0_i32_57] : memref<16x384xf32, #tpu.memory_space<any>> -> memref<1x384xf32, #tpu.memory_space<any>>
    %c6_i32_58 = arith.constant 6 : i32
    %c0_i32_59 = arith.constant 0 : i32
    %83 = tpu.memref_slice %arg3[%c6_i32_58, %c0_i32_59] : memref<8x384xf32, #tpu.memory_space<vmem>> -> memref<1x384xf32, #tpu.memory_space<vmem>>
    %84 = tpu.memref_slice %arg4[%c6_i32_56] : memref<8x!tpu.dma_semaphore, #tpu.memory_space<semaphore_mem>> -> memref<1x!tpu.dma_semaphore, #tpu.memory_space<semaphore_mem>>
    %85 = tpu.memref_squeeze %84 : memref<1x!tpu.dma_semaphore, #tpu.memory_space<semaphore_mem>> -> memref<!tpu.dma_semaphore, #tpu.memory_space<semaphore_mem>>
    tpu.wait_dma2 semaphore(%85 : memref<!tpu.dma_semaphore, #tpu.memory_space<semaphore_mem>>) src(%82 : memref<1x384xf32, #tpu.memory_space<any>>) dst(%83 : memref<1x384xf32, #tpu.memory_space<vmem>>)
    %c7_i32_60 = arith.constant 7 : i32
    %c0_i32_61 = arith.constant 0 : i32
    %86 = tpu.memref_slice %arg2[%25, %c0_i32_61] : memref<16x384xf32, #tpu.memory_space<any>> -> memref<1x384xf32, #tpu.memory_space<any>>
    %c7_i32_62 = arith.constant 7 : i32
    %c0_i32_63 = arith.constant 0 : i32
    %87 = tpu.memref_slice %arg3[%c7_i32_62, %c0_i32_63] : memref<8x384xf32, #tpu.memory_space<vmem>> -> memref<1x384xf32, #tpu.memory_space<vmem>>
    %88 = tpu.memref_slice %arg4[%c7_i32_60] : memref<8x!tpu.dma_semaphore, #tpu.memory_space<semaphore_mem>> -> memref<1x!tpu.dma_semaphore, #tpu.memory_space<semaphore_mem>>
    %89 = tpu.memref_squeeze %88 : memref<1x!tpu.dma_semaphore, #tpu.memory_space<semaphore_mem>> -> memref<!tpu.dma_semaphore, #tpu.memory_space<semaphore_mem>>
    tpu.wait_dma2 semaphore(%89 : memref<!tpu.dma_semaphore, #tpu.memory_space<semaphore_mem>>) src(%86 : memref<1x384xf32, #tpu.memory_space<any>>) dst(%87 : memref<1x384xf32, #tpu.memory_space<vmem>>)
    return
  }
  func.func @transform_1(%arg0: i32, %arg1: memref<8xi32, #tpu.memory_space<smem>>) -> (i32, i32) {
    %c0_i32 = arith.constant 0 : i32
    %c0_i32_0 = arith.constant 0 : i32
    return %arg0, %c0_i32 : i32, i32
  }
}

</mosaic_0001>

<llo_original>
// kernel: tpu_custom_call.1
$region0: #{tpu_custom_call.1}
  #allocation0 [shape = 'u32[]', space=smem, size = 0x4, offset = 0x4, fixed_abs, tag = 'smem constant byte address 0x4 - core index']
  #allocation1 [shape = 'u32[72,128]{1,0:T(1,128)}', space=vmem, size = 0x9000, scoped, tag = 'internal scratch']
  #allocation2 [shape = 's32[8]{0}', space=sflag, size = 0x20, scoped, tag = 'scratch operand']
  #allocation3 [shape = 's32[1]{0}', space=sflag, size = 0x4, scoped, tag = 'scoped memory for tpu_custom_call.1']
  #allocation4 [shape = 'u8[512]{0}', space=smem, size = 0x200, scoped, tag = 'prefetched SMEM operand 0']
  #allocation7 [shape = 's32[]', space=sflag, size = 0x4, offset = 0, fixed_abs, tag = 'sflag constant byte address 0x0 - dummy sync flag']
  #allocation8 [shape = 's32[]', space=sflag, size = 0x4, offset = 0, fixed_abs, tag = 'sflag constant byte address 0x0 - dummy sync flag']
  #allocation9 [shape = 's32[]', space=sflag, size = 0x4, offset = 0, fixed_abs, tag = 'sflag constant byte address 0x0 - dummy sync flag']
  #allocation10 [shape = 's32[]', space=sflag, size = 0x4, offset = 0, fixed_abs, tag = 'sflag constant byte address 0x0 - dummy sync flag']
  #allocation11 [shape = 's32[]', space=sflag, size = 0x4, offset = 0, fixed_abs, tag = 'sflag constant byte address 0x0 - dummy sync flag']
  #allocation12 [shape = 's32[]', space=sflag, size = 0x4, offset = 0, fixed_abs, tag = 'sflag constant byte address 0x0 - dummy sync flag']
  #allocation13 [shape = 's32[]', space=sflag, size = 0x4, offset = 0, fixed_abs, tag = 'sflag constant byte address 0x0 - dummy sync flag']
  #allocation14 [shape = 's32[]', space=sflag, size = 0x4, offset = 0, fixed_abs, tag = 'sflag constant byte address 0x0 - dummy sync flag']
  %s0 = inlined_call_operand.hbm [shape: s32[8], index: 0, kind: input, shape index: {}]
  %s1 = inlined_call_operand.hbm [shape: f32[16,384], index: 1, kind: input, shape index: {}]
  %s2 = inlined_call_operand.hbm [shape: f32[8,384], index: 2, kind: output, shape index: {}]
  %s3 = sld [smem:[#allocation0]]
  $region10: #{tpu_custom_call.1} parent=0
    _
  %s5 = ssub.s32 1, %s3
  %s6 = scalar_select 0, %s5, %s3
  %s8 = sshll.u32 %s0, 4
  %s9 = int_to_ptr.hbm [resolvable:$true] %s8
  %11 = dma.hbm_to_smem %s9, 16, [#allocation4], [#allocation3]
  %13 = dma.done [#allocation3], 16
  %14 = sfence
  $region1: #{tpu_custom_call.1} parent=0
    #allocation5 [shape = 'u8[12288]{0}', space=vmem, size = 0x3000, scoped, tag = 'output window, operand 0, single buffered']
    #allocation6 [shape = 's32[1]{0}', space=sflag, size = 0x4, scoped, tag = 'scoped memory for tpu_custom_call.1']
    %15 = vsyncpa [#allocation6], 0
    %s16 = smul.u32 0, 8
    %s17 = sld [smem:[#allocation4 + %s16]]
    %s18 = sadd.s32 %s16, 1
    %s19 = sld [smem:[#allocation4 + %s18]]
    %s20 = sadd.s32 %s16, 2
    %s21 = sld [smem:[#allocation4 + %s20]]
    %s22 = sadd.s32 %s16, 3
    %s23 = sld [smem:[#allocation4 + %s22]]
    %s24 = sadd.s32 %s16, 4
    %s25 = sld [smem:[#allocation4 + %s24]]
    %s26 = sadd.s32 %s16, 5
    %s27 = sld [smem:[#allocation4 + %s26]]
    %s28 = sadd.s32 %s16, 6
    %s29 = sld [smem:[#allocation4 + %s28]]
    %s30 = sadd.s32 %s16, 7
    %s31 = sld [smem:[#allocation4 + %s30]]
    %s32 = sshrl.u32 %s17, 3
    %s33 = sand.u32 %s17, 7
    %s34 = smul.u32 %s32, 24
    %s35 = sadd.s32 %s33, %s34
    %s36 = scalar_lea.hbm %s1, %s35
    %s37 = sshll.u32 %s36, 4
    %s38 = int_to_ptr.hbm [resolvable:$true] %s37
    %s39 = sshll.u32 [#allocation5], 4
    %s40 = int_to_ptr.vmem [resolvable:$true] %s39
    %44 = dma.hbm_to_vmem [thread:$0]  %s38, 48, %s40, [#allocation2], 128, 128, 1
    %s45 = sshrl.u32 %s19, 3
    %s46 = sand.u32 %s19, 7
    %s47 = smul.u32 %s45, 24
    %s48 = sadd.s32 %s46, %s47
    %s49 = scalar_lea.hbm %s1, %s48
    %s50 = scalar_lea.vmem [#allocation5], 1
    %s51 = scalar_lea.sflag [#allocation2], 1
    %s52 = sshll.u32 %s49, 4
    %s53 = int_to_ptr.hbm [resolvable:$true] %s52
    %s54 = sshll.u32 %s50, 4
    %s55 = int_to_ptr.vmem [resolvable:$true] %s54
    %59 = dma.hbm_to_vmem [thread:$0]  %s53, 48, %s55, %s51, 128, 128, 1
    %s60 = sshrl.u32 %s21, 3
    %s61 = sand.u32 %s21, 7
    %s62 = smul.u32 %s60, 24
    %s63 = sadd.s32 %s61, %s62
    %s64 = scalar_lea.hbm %s1, %s63
    %s65 = scalar_lea.vmem [#allocation5], 2
    %s66 = scalar_lea.sflag [#allocation2], 2
    %s67 = sshll.u32 %s64, 4
    %s68 = int_to_ptr.hbm [resolvable:$true] %s67
    %s69 = sshll.u32 %s65, 4
    %s70 = int_to_ptr.vmem [resolvable:$true] %s69
    %74 = dma.hbm_to_vmem [thread:$0]  %s68, 48, %s70, %s66, 128, 128, 1
    %s75 = sshrl.u32 %s23, 3
    %s76 = sand.u32 %s23, 7
    %s77 = smul.u32 %s75, 24
    %s78 = sadd.s32 %s76, %s77
    %s79 = scalar_lea.hbm %s1, %s78
    %s80 = scalar_lea.vmem [#allocation5], 3
    %s81 = scalar_lea.sflag [#allocation2], 3
    %s82 = sshll.u32 %s79, 4
    %s83 = int_to_ptr.hbm [resolvable:$true] %s82
    %s84 = sshll.u32 %s80, 4
    %s85 = int_to_ptr.vmem [resolvable:$true] %s84
    %89 = dma.hbm_to_vmem [thread:$0]  %s83, 48, %s85, %s81, 128, 128, 1
    %s90 = sshrl.u32 %s25, 3
    %s91 = sand.u32 %s25, 7
    %s92 = smul.u32 %s90, 24
    %s93 = sadd.s32 %s91, %s92
    %s94 = scalar_lea.hbm %s1, %s93
    %s95 = scalar_lea.vmem [#allocation5], 4
    %s96 = scalar_lea.sflag [#allocation2], 4
    %s97 = sshll.u32 %s94, 4
    %s98 = int_to_ptr.hbm [resolvable:$true] %s97
    %s99 = sshll.u32 %s95, 4
    %s100 = int_to_ptr.vmem [resolvable:$true] %s99
    %104 = dma.hbm_to_vmem [thread:$0]  %s98, 48, %s100, %s96, 128, 128, 1
    %s105 = sshrl.u32 %s27, 3
    %s106 = sand.u32 %s27, 7
    %s107 = smul.u32 %s105, 24
    %s108 = sadd.s32 %s106, %s107
    %s109 = scalar_lea.hbm %s1, %s108
    %s110 = scalar_lea.vmem [#allocation5], 5
    %s111 = scalar_lea.sflag [#allocation2], 5
    %s112 = sshll.u32 %s109, 4
    %s113 = int_to_ptr.hbm [resolvable:$true] %s112
    %s114 = sshll.u32 %s110, 4
    %s115 = int_to_ptr.vmem [resolvable:$true] %s114
    %119 = dma.hbm_to_vmem [thread:$0]  %s113, 48, %s115, %s111, 128, 128, 1
    %s120 = sshrl.u32 %s29, 3
    %s121 = sand.u32 %s29, 7
    %s122 = smul.u32 %s120, 24
    %s123 = sadd.s32 %s121, %s122
    %s124 = scalar_lea.hbm %s1, %s123
    %s125 = scalar_lea.vmem [#allocation5], 6
    %s126 = scalar_lea.sflag [#allocation2], 6
    %s127 = sshll.u32 %s124, 4
    %s128 = int_to_ptr.hbm [resolvable:$true] %s127
    %s129 = sshll.u32 %s125, 4
    %s130 = int_to_ptr.vmem [resolvable:$true] %s129
    %134 = dma.hbm_to_vmem [thread:$0]  %s128, 48, %s130, %s126, 128, 128, 1
    %s135 = sshrl.u32 %s31, 3
    %s136 = sand.u32 %s31, 7
    %s137 = smul.u32 %s135, 24
    %s138 = sadd.s32 %s136, %s137
    %s139 = scalar_lea.hbm %s1, %s138
    %s140 = scalar_lea.vmem [#allocation5], 7
    %s141 = scalar_lea.sflag [#allocation2], 7
    %s142 = sshll.u32 %s139, 4
    %s143 = int_to_ptr.hbm [resolvable:$true] %s142
    %s144 = sshll.u32 %s140, 4
    %s145 = int_to_ptr.vmem [resolvable:$true] %s144
    %149 = dma.hbm_to_vmem [thread:$0]  %s143, 48, %s145, %s141, 128, 128, 1
    %s150 = smul.u32 1, 3
    %s151 = sshll.u32 %s150, 4
    %152 = dma.done [#allocation2], %s151
    %s153 = sshll.u32 %s150, 4
    %154 = dma.done %s51, %s153
    %s155 = sshll.u32 %s150, 4
    %156 = dma.done %s66, %s155
    %s157 = sshll.u32 %s150, 4
    %158 = dma.done %s81, %s157
    %s159 = sshll.u32 %s150, 4
    %160 = dma.done %s96, %s159
    %s161 = sshll.u32 %s150, 4
    %162 = dma.done %s111, %s161
    %s163 = sshll.u32 %s150, 4
    %164 = dma.done %s126, %s163
    %s165 = sshll.u32 %s150, 4
    %166 = dma.done %s141, %s165
    // Predicated region
    $region2: #{tpu_custom_call.1} parent=1 // pred_check
      _
    $region3: #{tpu_custom_call.1} parent=1 // pred_check_branch
      %168 = sbr.rel (0) target = $region5
    $region4: #{tpu_custom_call.1} parent=1 // pred_region
      %170 = vsyncadd [#allocation6], 0
      %s172 = sshll.u32 [#allocation5], 4
      %s173 = int_to_ptr.vmem [resolvable:$true] %s172
      %s174 = sshll.u32 %s2, 4
      %s175 = int_to_ptr.hbm [resolvable:$true] %s174
      %177 = dma.vmem_to_hbm [thread:$0]  %s173, 384, %s175, [#allocation6]
    $region5: #{tpu_custom_call.1} parent=1 // pred_fallthru
      _
    // Predicated region
    $region6: #{tpu_custom_call.1} parent=1 // pred_check
      _
    $region7: #{tpu_custom_call.1} parent=1 // pred_check_branch
      %179 = sbr.rel (0) target = $region9
    $region8: #{tpu_custom_call.1} parent=1 // pred_region
      %181 = dma.done [#allocation6], 384
    $region9: #{tpu_custom_call.1} parent=1 // pred_fallthru
      _
    %182 = vsyncpa [#allocation6], 1
  %183 = vsyncmov [#allocation2]
  %s184 = vpop.sfrf %183
  %p185 = scmp.eq.s32.totalorder %s184, 0
  %p186 = pneg %p185
  %188 = shalt.err (%p186)
  %s189 = scalar_lea.sflag [#allocation2], 1
  %190 = vsyncmov %s189
  %s191 = vpop.sfrf %190
  %p192 = scmp.eq.s32.totalorder %s191, 0
  %p193 = pneg %p192
  %195 = shalt.err (%p193)
  %s196 = scalar_lea.sflag [#allocation2], 2
  %197 = vsyncmov %s196
  %s198 = vpop.sfrf %197
  %p199 = scmp.eq.s32.totalorder %s198, 0
  %p200 = pneg %p199
  %202 = shalt.err (%p200)
  %s203 = scalar_lea.sflag [#allocation2], 3
  %204 = vsyncmov %s203
  %s205 = vpop.sfrf %204
  %p206 = scmp.eq.s32.totalorder %s205, 0
  %p207 = pneg %p206
  %209 = shalt.err (%p207)
  %s210 = scalar_lea.sflag [#allocation2], 4
  %211 = vsyncmov %s210
  %s212 = vpop.sfrf %211
  %p213 = scmp.eq.s32.totalorder %s212, 0
  %p214 = pneg %p213
  %216 = shalt.err (%p214)
  %s217 = scalar_lea.sflag [#allocation2], 5
  %218 = vsyncmov %s217
  %s219 = vpop.sfrf %218
  %p220 = scmp.eq.s32.totalorder %s219, 0
  %p221 = pneg %p220
  %223 = shalt.err (%p221)
  %s224 = scalar_lea.sflag [#allocation2], 6
  %225 = vsyncmov %s224
  %s226 = vpop.sfrf %225
  %p227 = scmp.eq.s32.totalorder %s226, 0
  %p228 = pneg %p227
  %230 = shalt.err (%p228)
  %s231 = scalar_lea.sflag [#allocation2], 7
  %232 = vsyncmov %s231
  %s233 = vpop.sfrf %232
  %p234 = scmp.eq.s32.totalorder %s233, 0
  %p235 = pneg %p234
  %237 = shalt.err (%p235)

</llo_original>
